<compile_context>
chip_gen: v7x
topology: tpu7x:2x2x1
jax: 0.10.0
libtpu: 0.0.40
codegen_flags: <defaults>
</compile_context>

<pallas_src>
import numpy as np
import jax
import jax.numpy as jnp
from jax.experimental import pallas as pl
from jax.experimental.pallas import tpu as pltpu


# ----------------------------------------------------------------------------
# Pallas kernel: fused im2col-Conv3x3(+BN folded) + GELU(exact) + Conv1x1
# ----------------------------------------------------------------------------
def conv_head_kernel(p_ref, w3_ref, w1_ref, params_ref, o_ref):
    # p_ref      : (9*Cin, N*H*W)   bf16  transposed im2col patches (whole batch)
    # w3_ref     : (Cin, 9*Cin)     bf16  3x3 conv weight, BN scale pre-folded
    # w1_ref     : (NC, Cin)        bf16  1x1 conv weight
    # params_ref : (Cin+NC, 1)      f32   [0:Cin]   = beta + scale*(b3 - mean)
    #                                     [Cin:end] = 1x1 conv bias
    # o_ref      : (NC, N*H*W)      f32   output, channels x (batch*spatial)
    cin = w3_ref.shape[0]
    nc = w1_ref.shape[0]

    # 3x3 conv (BN scale already folded into the weight) as ONE MXU matmul
    # over K = 9*Cin, f32 accumulation.
    z = jnp.dot(w3_ref[...], p_ref[...],
                preferred_element_type=jnp.float32)          # (Cin, L) f32

    # BN(eval) + conv bias, folded to a single per-channel shift.
    z = z + params_ref[0:cin, :]

    # Exact GELU (PyTorch default, approximate='none'):
    # 0.5 * x * (1 + erf(x / sqrt(2)))
    z = 0.5 * z * (1.0 + jax.lax.erf(z * np.float32(1.0 / np.sqrt(2.0))))

    # 1x1 conv == matmul over channels; bf16 operands, f32 accumulate.
    out = jnp.dot(w1_ref[...], z.astype(jnp.bfloat16),
                  preferred_element_type=jnp.float32)        # (NC, L) f32
    out = out + params_ref[cin:cin + nc, :]

    o_ref[...] = out.astype(o_ref.dtype)                     # lane-dense store


# ----------------------------------------------------------------------------
# Wrapper: NCHW in / NCHW out, single grid step (batch folded into lanes).
# ----------------------------------------------------------------------------
def conv_head_pallas(x_nchw, w3_oihw, b3, gamma, beta, rmean, rvar,
                     w1_oihw, b1, eps=1e-5):
    N, Cin, H, W = x_nchw.shape
    NC = w1_oihw.shape[0]
    HW = H * W
    L = N * HW
    K9 = 9 * Cin

    # --- glue (plain JAX): bf16 im2col + BN folding ---------------------------
    # Cast BEFORE padding / patch-stacking so the 9x-expanded tensor is bf16.
    x_bf = x_nchw.astype(jnp.bfloat16)
    x_pad = jnp.pad(x_bf, ((0, 0), (0, 0), (1, 1), (1, 1)))   # (N,Cin,H+2,W+2)

    # Transposed im2col with the batch folded into the lane axis:
    #   patches[(kh*3+kw)*Cin + ci, n*HW + h*W + w] = x_pad[n, ci, h+kh, w+kw]
    taps = [x_pad[:, :, kh:kh + H, kw:kw + W]
            for kh in range(3) for kw in range(3)]            # 9 x (N,Cin,H,W)
    patches = jnp.stack(taps, axis=0)                         # (9,N,Cin,H,W)
    patches = jnp.transpose(patches, (0, 2, 1, 3, 4)).reshape(K9, L)

    # Fold BN(eval) into the conv3x3 weight (scale) and a per-channel shift.
    bn_scale = (gamma / jnp.sqrt(rvar + eps)).astype(jnp.float32)          # (Cin,)
    bn_shift = (beta.astype(jnp.float32)
                + bn_scale * (b3.astype(jnp.float32) - rmean.astype(jnp.float32)))

    # Conv3x3 weight in im2col layout (O, kh, kw, I) -> (Cin, 9*Cin), scaled in
    # f32, then cast to bf16 for the MXU.
    w3_mat = jnp.transpose(w3_oihw, (0, 2, 3, 1)).reshape(Cin, K9)
    w3_mat = (w3_mat * bn_scale[:, None]).astype(jnp.bfloat16)
    # Conv1x1 weight: (NC, Cin).
    w1_mat = w1_oihw[:, :, 0, 0].astype(jnp.bfloat16)

    # Single small per-channel parameter operand: [shift (Cin); bias1 (NC)].
    params = jnp.concatenate(
        [bn_shift, b1.astype(jnp.float32)]).reshape(Cin + NC, 1)

    # Advisory cost estimate for XLA's scheduler.
    flops = 2 * L * (K9 * Cin + Cin * NC)
    bytes_accessed = (K9 * L * 2                 # bf16 patches
                      + Cin * K9 * 2 + NC * Cin * 2
                      + (Cin + NC) * 4
                      + NC * L * 4)              # f32 output
    cost = pl.CostEstimate(flops=flops,
                           transcendentals=L * Cin,
                           bytes_accessed=bytes_accessed)

    out = pl.pallas_call(
        conv_head_kernel,
        out_shape=jax.ShapeDtypeStruct((NC, L), jnp.float32),
        grid_spec=pltpu.PrefetchScalarGridSpec(
            num_scalar_prefetch=0,
            grid=(1,),
            in_specs=[
                pl.BlockSpec((K9, L), lambda i: (0, 0)),
                pl.BlockSpec((Cin, K9), lambda i: (0, 0)),
                pl.BlockSpec((NC, Cin), lambda i: (0, 0)),
                pl.BlockSpec((Cin + NC, 1), lambda i: (0, 0)),
            ],
            out_specs=pl.BlockSpec((NC, L), lambda i: (0, 0)),
        ),
        compiler_params=pltpu.CompilerParams(
            dimension_semantics=("arbitrary",),
            vmem_limit_bytes=32 * 1024 * 1024),
        cost_estimate=cost,
    )(patches, w3_mat, w1_mat, params)

    # (NC, N*HW) -> (N, NC, H, W): tiny post-transpose in plain JAX.
    return out.reshape(NC, N, H, W).transpose(1, 0, 2, 3)


# ----------------------------------------------------------------------------
# Plain-JAX reference (NCHW, mirrors the PyTorch forward exactly, eval BN)
# ----------------------------------------------------------------------------
def conv_head_reference(x_nchw, w3_oihw, b3, gamma, beta, rmean, rvar,
                        w1_oihw, b1, eps=1e-5):
    y = jax.lax.conv_general_dilated(
        x_nchw, w3_oihw, window_strides=(1, 1), padding=((1, 1), (1, 1)),
        dimension_numbers=("NCHW", "OIHW", "NCHW"))
    y = y + b3[None, :, None, None]
    y = (y - rmean[None, :, None, None]) / jnp.sqrt(rvar + eps)[None, :, None, None]
    y = y * gamma[None, :, None, None] + beta[None, :, None, None]
    y = 0.5 * y * (1.0 + jax.lax.erf(y / np.sqrt(2.0)))
    out = jax.lax.conv_general_dilated(
        y, w1_oihw, window_strides=(1, 1), padding=((0, 0), (0, 0)),
        dimension_numbers=("NCHW", "OIHW", "NCHW"))
    return out + b1[None, :, None, None]


if __name__ == "__main__":
    # Small shapes consistent with ConvHead(in_channels=16, num_classes=8).
    N, Cin, H, W = 2, 16, 16, 16
    NC = 8

    key = jax.random.PRNGKey(0)
    ks = jax.random.split(key, 9)

    x = jax.random.normal(ks[0], (N, Cin, H, W), dtype=jnp.float32)

    # Deterministic parameter init (mirrors __init__ shapes / scales).
    w3 = 0.02 * jax.random.normal(ks[1], (Cin, Cin, 3, 3), jnp.float32)   # trunc_normal std=0.02
    b3 = 0.05 * jax.random.normal(ks[2], (Cin,), jnp.float32)
    gamma = 1.0 + 0.1 * jax.random.normal(ks[3], (Cin,), jnp.float32)
    beta = 0.1 * jax.random.normal(ks[4], (Cin,), jnp.float32)
    rmean = 0.1 * jax.random.normal(ks[5], (Cin,), jnp.float32)
    rvar = 0.5 + jnp.abs(jax.random.normal(ks[6], (Cin,), jnp.float32)) * 0.5
    w1 = (1.0 / np.sqrt(Cin)) * jax.random.normal(ks[7], (NC, Cin, 1, 1), jnp.float32)
    b1 = 0.05 * jax.random.normal(ks[8], (NC,), jnp.float32)

    out = conv_head_pallas(x, w3, b3, gamma, beta, rmean, rvar, w1, b1)
    out = jax.block_until_ready(out)

    ref = conv_head_reference(x, w3, b3, gamma, beta, rmean, rvar, w1, b1)
    ref = jax.block_until_ready(ref)

    assert out.shape == (N, NC, H, W), out.shape
    # bf16 MXU operands / bf16 im2col activations -> loosened tolerance vs the
    # pure-f32 reference (deliberate precision trade-off, part of the contract).
    np.testing.assert_allclose(np.asarray(out), np.asarray(ref),
                               rtol=2e-2, atol=2e-2)
    print("KERNEL_OK")
</pallas_src>

<mosaic_0001>
module attributes {stable_mosaic.version = 11 : i64} {
  func.func @conv_head_kernel(%arg0: i32, %arg1: memref<144x512xbf16, #tpu.memory_space<vmem>>, %arg2: memref<16x144xbf16, #tpu.memory_space<vmem>>, %arg3: memref<8x16xbf16, #tpu.memory_space<vmem>>, %arg4: memref<24x1xf32, #tpu.memory_space<vmem>>, %arg5: memref<8x512xf32, #tpu.memory_space<vmem>>) attributes {dimension_semantics = [#tpu.dimension_semantics<arbitrary>], iteration_bounds = array<i64: 1>, scalar_prefetch = 0 : i64, scratch_operands = 0 : i64, tpu.core_type = #tpu.core_type<tc>, window_params = [{pipeline_mode = #tpu.pipeline_mode<synchronous>, transform_indices = @transform_0, window_bounds = array<i64: 144, 512>}, {pipeline_mode = #tpu.pipeline_mode<synchronous>, transform_indices = @transform_1, window_bounds = array<i64: 16, 144>}, {pipeline_mode = #tpu.pipeline_mode<synchronous>, transform_indices = @transform_2, window_bounds = array<i64: 8, 16>}, {pipeline_mode = #tpu.pipeline_mode<synchronous>, transform_indices = @transform_3, window_bounds = array<i64: 24, 1>}, {pipeline_mode = #tpu.pipeline_mode<synchronous>, transform_indices = @transform_4, window_bounds = array<i64: 8, 512>}]} {
    %c0 = arith.constant 0 : index
    %c0_0 = arith.constant 0 : index
    %0 = vector.load %arg2[%c0, %c0_0] : memref<16x144xbf16, #tpu.memory_space<vmem>>, vector<16x144xbf16>
    %c0_1 = arith.constant 0 : index
    %c0_2 = arith.constant 0 : index
    %1 = vector.load %arg1[%c0_1, %c0_2] : memref<144x512xbf16, #tpu.memory_space<vmem>>, vector<144x512xbf16>
    %cst = arith.constant dense<0.000000e+00> : vector<16x512xf32>
    %2 = tpu.matmul %0, %1, %cst {dimension_numbers = #tpu.dot_dimension_numbers<[1], [0], [0], [1], [0, 0, 1, 1], [], []>} : vector<16x144xbf16>, vector<144x512xbf16>, vector<16x512xf32> -> vector<16x512xf32>
    %c0_3 = arith.constant 0 : index
    %c0_4 = arith.constant 0 : index
    %3 = vector.load %arg4[%c0_3, %c0_4] : memref<24x1xf32, #tpu.memory_space<vmem>>, vector<16x1xf32>
    %4 = vector.broadcast %3 : vector<16x1xf32> to vector<16x512xf32>
    %5 = arith.addf %2, %4 : vector<16x512xf32>
    %cst_5 = arith.constant 5.000000e-01 : f32
    %6 = vector.broadcast %cst_5 : f32 to vector<16x512xf32>
    %7 = arith.mulf %6, %5 : vector<16x512xf32>
    %cst_6 = arith.constant 0.707106769 : f32
    %8 = vector.broadcast %cst_6 : f32 to vector<16x512xf32>
    %9 = arith.mulf %5, %8 : vector<16x512xf32>
    %10 = math.erf %9 : vector<16x512xf32>
    %cst_7 = arith.constant 1.000000e+00 : f32
    %11 = vector.broadcast %cst_7 : f32 to vector<16x512xf32>
    %12 = arith.addf %11, %10 : vector<16x512xf32>
    %13 = arith.mulf %7, %12 : vector<16x512xf32>
    %c0_8 = arith.constant 0 : index
    %c0_9 = arith.constant 0 : index
    %14 = vector.load %arg3[%c0_8, %c0_9] : memref<8x16xbf16, #tpu.memory_space<vmem>>, vector<8x16xbf16>
    %15 = arith.truncf %13 : vector<16x512xf32> to vector<16x512xbf16>
    %cst_10 = arith.constant dense<0.000000e+00> : vector<8x512xf32>
    %16 = tpu.matmul %14, %15, %cst_10 {dimension_numbers = #tpu.dot_dimension_numbers<[1], [0], [0], [1], [0, 0, 1, 1], [], []>} : vector<8x16xbf16>, vector<16x512xbf16>, vector<8x512xf32> -> vector<8x512xf32>
    %c16 = arith.constant 16 : index
    %c0_11 = arith.constant 0 : index
    %17 = vector.load %arg4[%c16, %c0_11] : memref<24x1xf32, #tpu.memory_space<vmem>>, vector<8x1xf32>
    %18 = vector.broadcast %17 : vector<8x1xf32> to vector<8x512xf32>
    %19 = arith.addf %16, %18 : vector<8x512xf32>
    %c0_12 = arith.constant 0 : index
    %c0_13 = arith.constant 0 : index
    %20 = vector.load %arg5[%c0_12, %c0_13] : memref<8x512xf32, #tpu.memory_space<vmem>>, vector<8x512xf32>
    tpu.vector_store %arg5[%c0_12, %c0_13], %19 {strides = array<i32>} : memref<8x512xf32, #tpu.memory_space<vmem>>, vector<8x512xf32>,
    return
  }
  func.func @transform_0(%arg0: i32) -> (i32, i32) {
    %c0_i32 = arith.constant 0 : i32
    %c0_i32_0 = arith.constant 0 : i32
    %c0_i32_1 = arith.constant 0 : i32
    return %c0_i32, %c0_i32_0 : i32, i32
  }
  func.func @transform_1(%arg0: i32) -> (i32, i32) {
    %c0_i32 = arith.constant 0 : i32
    %c0_i32_0 = arith.constant 0 : i32
    %c0_i32_1 = arith.constant 0 : i32
    return %c0_i32, %c0_i32_0 : i32, i32
  }
  func.func @transform_2(%arg0: i32) -> (i32, i32) {
    %c0_i32 = arith.constant 0 : i32
    %c0_i32_0 = arith.constant 0 : i32
    %c0_i32_1 = arith.constant 0 : i32
    return %c0_i32, %c0_i32_0 : i32, i32
  }
  func.func @transform_3(%arg0: i32) -> (i32, i32) {
    %c0_i32 = arith.constant 0 : i32
    %c0_i32_0 = arith.constant 0 : i32
    %c0_i32_1 = arith.constant 0 : i32
    return %c0_i32, %c0_i32_0 : i32, i32
  }
  func.func @transform_4(%arg0: i32) -> (i32, i32) {
    %c0_i32 = arith.constant 0 : i32
    %c0_i32_0 = arith.constant 0 : i32
    %c0_i32_1 = arith.constant 0 : i32
    return %c0_i32, %c0_i32_0 : i32, i32
  }
}

</mosaic_0001>

<llo_original>
// kernel: tpu_custom_call.1
$region0: #{tpu_custom_call.1}
  #allocation0 [shape = 'u32[]', space=smem, size = 0x4, offset = 0x4, fixed_abs, tag = 'smem constant byte address 0x4 - core index']
  #allocation1 [shape = 'u32[144,128]{1,0:T(1,128)}', space=vmem, size = 0x12000, scoped, tag = 'internal scratch']
  %s0 = inlined_call_operand.hbm [shape: bf16[144,512], index: 0, kind: input, shape index: {}]
  %s1 = inlined_call_operand.vmem [shape: bf16[16,144], index: 1, kind: input, shape index: {}]
  %s2 = inlined_call_operand.vmem [shape: bf16[8,16], index: 2, kind: input, shape index: {}]
  %s3 = inlined_call_operand.vmem [shape: f32[24,1], index: 3, kind: input, shape index: {}]
  %s4 = inlined_call_operand.hbm [shape: f32[8,512], index: 4, kind: output, shape index: {}]
  %s5 = sld [smem:[#allocation0]]
  $region30: #{tpu_custom_call.1} parent=0
    _
  %s7 = ssub.s32 1, %s5
  %s8 = scalar_select 0, %s7, %s5
  $region1: #{tpu_custom_call.1} parent=0
    #allocation2 [shape = 'u8[147456]{0}', space=vmem, size = 0x24000, scoped, tag = 'input window, operand 0, single buffered']
    #allocation3 [shape = 's32[1]{0}', space=sflag, size = 0x4, scoped, tag = 'scoped memory for tpu_custom_call.1']
    #allocation4 [shape = 's32[1]{0}', space=sflag, size = 0x4, scoped, tag = 'scoped memory for tpu_custom_call.1']
    #allocation5 [shape = 'u8[16384]{0}', space=vmem, size = 0x4000, scoped, tag = 'output window, operand 0, single buffered']
    %9 = vsyncpa [#allocation3], 0
    %10 = vsyncpa [#allocation4], 0
    // Predicated region
    $region2: #{tpu_custom_call.1} parent=1 // pred_check
      _
    $region3: #{tpu_custom_call.1} parent=1 // pred_check_branch
      %12 = sbr.rel (0) target = $region5
    $region4: #{tpu_custom_call.1} parent=1 // pred_region
      %s14 = ssub.s32 4608, 4608
      %15 = vsyncadd [#allocation3], %s14
      %s16 = sshll.u32 [#allocation2], 4
      %s17 = int_to_ptr.vmem [resolvable:$true] %s16
      %22 = dma.hbm_to_vmem [thread:$0]  %s0, 4608, %s17, [#allocation3], 256, 256, 16
    $region5: #{tpu_custom_call.1} parent=1 // pred_fallthru
      _
    // Predicated region
    $region6: #{tpu_custom_call.1} parent=1 // pred_check
      _
    $region7: #{tpu_custom_call.1} parent=1 // pred_check_branch
      %24 = sbr.rel (0) target = $region9
    $region8: #{tpu_custom_call.1} parent=1 // pred_region
      _
    $region9: #{tpu_custom_call.1} parent=1 // pred_fallthru
      _
    // Predicated region
    $region10: #{tpu_custom_call.1} parent=1 // pred_check
      _
    $region11: #{tpu_custom_call.1} parent=1 // pred_check_branch
      %26 = sbr.rel (0) target = $region13
    $region12: #{tpu_custom_call.1} parent=1 // pred_region
      _
    $region13: #{tpu_custom_call.1} parent=1 // pred_fallthru
      _
    // Predicated region
    $region14: #{tpu_custom_call.1} parent=1 // pred_check
      _
    $region15: #{tpu_custom_call.1} parent=1 // pred_check_branch
      %28 = sbr.rel (0) target = $region17
    $region16: #{tpu_custom_call.1} parent=1 // pred_region
      _
    $region17: #{tpu_custom_call.1} parent=1 // pred_fallthru
      _
    // Predicated region
    $region18: #{tpu_custom_call.1} parent=1 // pred_check
      _
    $region19: #{tpu_custom_call.1} parent=1 // pred_check_branch
      %30 = sbr.rel (0) target = $region21
    $region20: #{tpu_custom_call.1} parent=1 // pred_region
      %31 = dma.done [#allocation3], 4608
    $region21: #{tpu_custom_call.1} parent=1 // pred_fallthru
      _
    %v33 = vld [vmem:[%s1] sm:$0xff]
    %v34 = vld [vmem:[%s1 + $0x8] sm:$0xff]
    %v35 = vld [vmem:[#allocation2] sm:$0xff]
    %v36 = vld [vmem:[#allocation2 + $0x8] sm:$0xff]
    %v37 = vld [vmem:[#allocation2 + $0x10] sm:$0xff]
    %v38 = vld [vmem:[#allocation2 + $0x18] sm:$0xff]
    %v39 = vld [vmem:[#allocation2 + $0x20] sm:$0xff]
    %v40 = vld [vmem:[#allocation2 + $0x28] sm:$0xff]
    %v41 = vld [vmem:[#allocation2 + $0x30] sm:$0xff]
    %v42 = vld [vmem:[#allocation2 + $0x38] sm:$0xff]
    %v43 = vld [vmem:[#allocation2 + $0x40] sm:$0xff]
    %v44 = vld [vmem:[#allocation2 + $0x48] sm:$0xff]
    %v45 = vld [vmem:[#allocation2 + $0x50] sm:$0xff]
    %v46 = vld [vmem:[#allocation2 + $0x58] sm:$0xff]
    %v47 = vld [vmem:[#allocation2 + $0x60] sm:$0xff]
    %v48 = vld [vmem:[#allocation2 + $0x68] sm:$0xff]
    %v49 = vld [vmem:[#allocation2 + $0x70] sm:$0xff]
    %v50 = vld [vmem:[#allocation2 + $0x78] sm:$0xff]
    %v51 = vld [vmem:[#allocation2 + $0x80] sm:$0xff]
    %v52 = vld [vmem:[#allocation2 + $0x88] sm:$0xff]
    %v53 = vld [vmem:[#allocation2 + $0x90] sm:$0xff]
    %v54 = vld [vmem:[#allocation2 + $0x98] sm:$0xff]
    %v55 = vld [vmem:[#allocation2 + $0xa0] sm:$0xff]
    %v56 = vld [vmem:[#allocation2 + $0xa8] sm:$0xff]
    %v57 = vld [vmem:[#allocation2 + $0xb0] sm:$0xff]
    %v58 = vld [vmem:[#allocation2 + $0xb8] sm:$0xff]
    %v59 = vld [vmem:[#allocation2 + $0xc0] sm:$0xff]
    %v60 = vld [vmem:[#allocation2 + $0xc8] sm:$0xff]
    %v61 = vld [vmem:[#allocation2 + $0xd0] sm:$0xff]
    %v62 = vld [vmem:[#allocation2 + $0xd8] sm:$0xff]
    %v63 = vld [vmem:[#allocation2 + $0xe0] sm:$0xff]
    %v64 = vld [vmem:[#allocation2 + $0xe8] sm:$0xff]
    %v65 = vld [vmem:[#allocation2 + $0xf0] sm:$0xff]
    %v66 = vld [vmem:[#allocation2 + $0xf8] sm:$0xff]
    %v67 = vld [vmem:[#allocation2 + $0x100] sm:$0xff]
    %v68 = vld [vmem:[#allocation2 + $0x108] sm:$0xff]
    %v69 = vld [vmem:[#allocation2 + $0x110] sm:$0xff]
    %v70 = vld [vmem:[#allocation2 + $0x118] sm:$0xff]
    %v71 = vld [vmem:[%s3] sm:$0xff]
    %v72 = vld [vmem:[%s3 + $0x8] sm:$0xff]
    %74 = vset.pattern.permute.xlu0 0
    %75 = vperm.xlu0 %74, %v71
    %v76 = vpop.permute.xlu0 %75
    %79 = vset.pattern.permute.xlu0 0
    %80 = vperm.xlu0 %79, %v72
    %v81 = vpop.permute.xlu0 %80
    %v85 = vunpack.c.l.b16 %v33
    %v86 = vunpack.c.h.b16 %v33
    %v87 = vunpack.c.l.b16 %v34
    %v88 = vunpack.c.h.b16 %v34
    %v89 = vpack.c.b16 %v87, %v85
    %v90 = vpack.c.b16 %v88, %v86
    %v128 = vunpack.c.l.b16 %v35
    %v129 = vunpack.c.h.b16 %v35
    %v130 = vunpack.c.l.b16 %v36
    %v131 = vunpack.c.h.b16 %v36
    %v132 = vunpack.c.l.b16 %v37
    %v133 = vunpack.c.h.b16 %v37
    %v134 = vunpack.c.l.b16 %v38
    %v135 = vunpack.c.h.b16 %v38
    %v136 = vunpack.c.l.b16 %v39
    %v137 = vunpack.c.h.b16 %v39
    %v138 = vunpack.c.l.b16 %v40
    %v139 = vunpack.c.h.b16 %v40
    %v140 = vunpack.c.l.b16 %v41
    %v141 = vunpack.c.h.b16 %v41
    %v142 = vunpack.c.l.b16 %v42
    %v143 = vunpack.c.h.b16 %v42
    %v144 = vunpack.c.l.b16 %v43
    %v145 = vunpack.c.h.b16 %v43
    %v146 = vunpack.c.l.b16 %v44
    %v147 = vunpack.c.h.b16 %v44
    %v148 = vunpack.c.l.b16 %v45
    %v149 = vunpack.c.h.b16 %v45
    %v150 = vunpack.c.l.b16 %v46
    %v151 = vunpack.c.h.b16 %v46
    %v152 = vunpack.c.l.b16 %v47
    %v153 = vunpack.c.h.b16 %v47
    %v154 = vunpack.c.l.b16 %v48
    %v155 = vunpack.c.h.b16 %v48
    %v156 = vunpack.c.l.b16 %v49
    %v157 = vunpack.c.h.b16 %v49
    %v158 = vunpack.c.l.b16 %v50
    %v159 = vunpack.c.h.b16 %v50
    %v160 = vunpack.c.l.b16 %v51
    %v161 = vunpack.c.h.b16 %v51
    %v162 = vunpack.c.l.b16 %v52
    %v163 = vunpack.c.h.b16 %v52
    %v164 = vunpack.c.l.b16 %v53
    %v165 = vunpack.c.h.b16 %v53
    %v166 = vunpack.c.l.b16 %v54
    %v167 = vunpack.c.h.b16 %v54
    %v168 = vunpack.c.l.b16 %v55
    %v169 = vunpack.c.h.b16 %v55
    %v170 = vunpack.c.l.b16 %v56
    %v171 = vunpack.c.h.b16 %v56
    %v172 = vunpack.c.l.b16 %v57
    %v173 = vunpack.c.h.b16 %v57
    %v174 = vunpack.c.l.b16 %v58
    %v175 = vunpack.c.h.b16 %v58
    %v176 = vunpack.c.l.b16 %v59
    %v177 = vunpack.c.h.b16 %v59
    %v178 = vunpack.c.l.b16 %v60
    %v179 = vunpack.c.h.b16 %v60
    %v180 = vunpack.c.l.b16 %v61
    %v181 = vunpack.c.h.b16 %v61
    %v182 = vunpack.c.l.b16 %v62
    %v183 = vunpack.c.h.b16 %v62
    %v184 = vunpack.c.l.b16 %v63
    %v185 = vunpack.c.h.b16 %v63
    %v186 = vunpack.c.l.b16 %v64
    %v187 = vunpack.c.h.b16 %v64
    %v188 = vunpack.c.l.b16 %v65
    %v189 = vunpack.c.h.b16 %v65
    %v190 = vunpack.c.l.b16 %v66
    %v191 = vunpack.c.h.b16 %v66
    %v192 = vunpack.c.l.b16 %v67
    %v193 = vunpack.c.h.b16 %v67
    %v194 = vunpack.c.l.b16 %v68
    %v195 = vunpack.c.h.b16 %v68
    %v196 = vunpack.c.l.b16 %v69
    %v197 = vunpack.c.h.b16 %v69
    %v198 = vunpack.c.l.b16 %v70
    %v199 = vunpack.c.h.b16 %v70
    %v200 = vpack.c.b16 %v132, %v128
    %v201 = vpack.c.b16 %v133, %v129
    %v202 = vpack.c.b16 %v134, %v130
    %v203 = vpack.c.b16 %v135, %v131
    %v204 = vpack.c.b16 %v140, %v136
    %v205 = vpack.c.b16 %v141, %v137
    %v206 = vpack.c.b16 %v142, %v138
    %v207 = vpack.c.b16 %v143, %v139
    %v208 = vpack.c.b16 %v148, %v144
    %v209 = vpack.c.b16 %v149, %v145
    %v210 = vpack.c.b16 %v150, %v146
    %v211 = vpack.c.b16 %v151, %v147
    %v212 = vpack.c.b16 %v156, %v152
    %v213 = vpack.c.b16 %v157, %v153
    %v214 = vpack.c.b16 %v158, %v154
    %v215 = vpack.c.b16 %v159, %v155
    %v216 = vpack.c.b16 %v164, %v160
    %v217 = vpack.c.b16 %v165, %v161
    %v218 = vpack.c.b16 %v166, %v162
    %v219 = vpack.c.b16 %v167, %v163
    %v220 = vpack.c.b16 %v172, %v168
    %v221 = vpack.c.b16 %v173, %v169
    %v222 = vpack.c.b16 %v174, %v170
    %v223 = vpack.c.b16 %v175, %v171
    %v224 = vpack.c.b16 %v180, %v176
    %v225 = vpack.c.b16 %v181, %v177
    %v226 = vpack.c.b16 %v182, %v178
    %v227 = vpack.c.b16 %v183, %v179
    %v228 = vpack.c.b16 %v188, %v184
    %v229 = vpack.c.b16 %v189, %v185
    %v230 = vpack.c.b16 %v190, %v186
    %v231 = vpack.c.b16 %v191, %v187
    %v232 = vpack.c.b16 %v196, %v192
    %v233 = vpack.c.b16 %v197, %v193
    %v234 = vpack.c.b16 %v198, %v194
    %v235 = vpack.c.b16 %v199, %v195
    %vm272 = vcmask 130048
    %v274 = vsel %vm272, %v90, 0
    %276 = vmatprep.subr.bf16.mxu0 %v201
    %277 = vmatpush1.bf16.msra.mxu0 %v200
    %278 = vmatprep.subr.bf16.mxu0 %v205
    %279 = vmatpush1.bf16.msra.mxu0 %v204
    %280 = vmatprep.subr.bf16.mxu0 %v209
    %281 = vmatpush1.bf16.msra.mxu0 %v208
    %282 = vmatprep.subr.bf16.mxu0 %v213
    %283 = vmatpush1.bf16.msra.mxu0 %v212
    %284 = vmatprep.subr.bf16.mxu0 %v217
    %285 = vmatpush1.bf16.msra.mxu0 %v216
    %286 = vmatprep.subr.bf16.mxu0 %v221
    %287 = vmatpush1.bf16.msra.mxu0 %v220
    %288 = vmatprep.subr.bf16.mxu0 %v225
    %289 = vmatpush1.bf16.msra.mxu0 %v224
    %290 = vmatprep.subr.bf16.mxu0 %v229
    %291 = vmatpush1.bf16.msra.mxu0 %v228
    %292 = vmatprep.subr.bf16.mxu0 %v233
    %293 = vmatpush1.bf16.msra.mxu0 %v232
    %294 = vmatprep.subr.bf16.mxu0 0
    %295 = vmatpush1.bf16.msra.mxu0 0
    %296 = vmatprep.subr.bf16.mxu0 0
    %297 = vmatpush1.bf16.msra.mxu0 0
    %298 = vmatprep.subr.bf16.mxu0 0
    %299 = vmatpush1.bf16.msra.mxu0 0
    %300 = vmatprep.subr.bf16.mxu0 0
    %301 = vmatpush1.bf16.msra.mxu0 0
    %302 = vmatprep.subr.bf16.mxu0 0
    %303 = vmatpush1.bf16.msra.mxu0 0
    %304 = vmatprep.subr.bf16.mxu0 0
    %305 = vmatpush1.bf16.msra.mxu0 0
    %306 = vmatprep.subr.bf16.mxu0 0
    %307 = vmatpush1.bf16.msra.mxu0 0
    %308 = vmatprep.mubr.bf16.mxu0 %v274
    %309 = vmatmul.mubr.bf16.gmra.mrb[0].mxu0 %v89
    %v310 = vpop.f32.mrb[0].mxu0
    %v311 = vadd.f32 %v76, %v310
    %v312 = vpop.f32.mrb[0].mxu0
    %v313 = vadd.f32 %v76, %v312
    %v314 = vpop.f32.mrb[0].mxu0
    %v315 = vadd.f32 %v81, %v314
    %v316 = vpop.f32.mrb[0].mxu0
    %v317 = vadd.f32 %v81, %v316
    %318 = vdwg.mxu0
    %319 = vmatprep.subr.bf16.mxu0 %v203
    %320 = vmatpush1.bf16.msra.mxu0 %v202
    %321 = vmatprep.subr.bf16.mxu0 %v207
    %322 = vmatpush1.bf16.msra.mxu0 %v206
    %323 = vmatprep.subr.bf16.mxu0 %v211
    %324 = vmatpush1.bf16.msra.mxu0 %v210
    %325 = vmatprep.subr.bf16.mxu0 %v215
    %326 = vmatpush1.bf16.msra.mxu0 %v214
    %327 = vmatprep.subr.bf16.mxu0 %v219
    %328 = vmatpush1.bf16.msra.mxu0 %v218
    %329 = vmatprep.subr.bf16.mxu0 %v223
    %330 = vmatpush1.bf16.msra.mxu0 %v222
    %331 = vmatprep.subr.bf16.mxu0 %v227
    %332 = vmatpush1.bf16.msra.mxu0 %v226
    %333 = vmatprep.subr.bf16.mxu0 %v231
    %334 = vmatpush1.bf16.msra.mxu0 %v230
    %335 = vmatprep.subr.bf16.mxu0 %v235
    %336 = vmatpush1.bf16.msra.mxu0 %v234
    %337 = vmatprep.subr.bf16.mxu0 0
    %338 = vmatpush1.bf16.msra.mxu0 0
    %339 = vmatprep.subr.bf16.mxu0 0
    %340 = vmatpush1.bf16.msra.mxu0 0
    %341 = vmatprep.subr.bf16.mxu0 0
    %342 = vmatpush1.bf16.msra.mxu0 0
    %343 = vmatprep.subr.bf16.mxu0 0
    %344 = vmatpush1.bf16.msra.mxu0 0
    %345 = vmatprep.subr.bf16.mxu0 0
    %346 = vmatpush1.bf16.msra.mxu0 0
    %347 = vmatprep.subr.bf16.mxu0 0
    %348 = vmatpush1.bf16.msra.mxu0 0
    %349 = vmatprep.subr.bf16.mxu0 0
    %350 = vmatpush1.bf16.msra.mxu0 0
    %351 = vmatprep.mubr.bf16.mxu0 %v274
    %352 = vmatmul.mubr.bf16.gmra.mrb[0].mxu0 %v89
    %v353 = vpop.f32.mrb[0].mxu0
    %v354 = vadd.f32 %v76, %v353
    %v355 = vpop.f32.mrb[0].mxu0
    %v356 = vadd.f32 %v76, %v355
    %v357 = vpop.f32.mrb[0].mxu0
    %v358 = vadd.f32 %v81, %v357
    %v359 = vpop.f32.mrb[0].mxu0
    %v360 = vadd.f32 %v81, %v359
    %361 = vdwg.mxu0
    %v362 = vmul.f32 %v311, 0.5
    %v363 = vmul.f32 %v313, 0.5
    %v364 = vmul.f32 %v354, 0.5
    %v365 = vmul.f32 %v356, 0.5
    %v366 = vmul.f32 %v315, 0.5
    %v367 = vmul.f32 %v317, 0.5
    %v368 = vmul.f32 %v358, 0.5
    %v369 = vmul.f32 %v360, 0.5
    %v370 = vmul.f32 %v311, 0.70710677
    %v371 = vmul.f32 %v313, 0.70710677
    %v372 = vmul.f32 %v354, 0.70710677
    %v373 = vmul.f32 %v356, 0.70710677
    %v374 = vmul.f32 %v315, 0.70710677
    %v375 = vmul.f32 %v317, 0.70710677
    %v376 = vmul.f32 %v358, 0.70710677
    %v377 = vmul.f32 %v360, 0.70710677
    %v378 = verf.f32.pop %v370
    %v379 = verf.f32.pop %v371
    %v380 = verf.f32.pop %v372
    %v381 = verf.f32.pop %v373
    %v382 = verf.f32.pop %v374
    %v383 = verf.f32.pop %v375
    %v384 = verf.f32.pop %v376
    %v385 = verf.f32.pop %v377
    %v386 = vadd.f32 %v378, 1.0
    %v387 = vadd.f32 %v379, 1.0
    %v388 = vadd.f32 %v380, 1.0
    %v389 = vadd.f32 %v381, 1.0
    %v390 = vadd.f32 %v382, 1.0
    %v391 = vadd.f32 %v383, 1.0
    %v392 = vadd.f32 %v384, 1.0
    %v393 = vadd.f32 %v385, 1.0
    %v394 = vmul.f32 %v362, %v386
    %v395 = vmul.f32 %v363, %v387
    %v396 = vmul.f32 %v364, %v388
    %v397 = vmul.f32 %v365, %v389
    %v398 = vmul.f32 %v366, %v390
    %v399 = vmul.f32 %v367, %v391
    %v400 = vmul.f32 %v368, %v392
    %v401 = vmul.f32 %v369, %v393
    %v402 = vld [vmem:[%s2] sm:$0xf]
    %v403 = vpack.c.bf16 %v398, %v394
    %v404 = vpack.c.bf16 %v399, %v395
    %v405 = vpack.c.bf16 %v400, %v396
    %v406 = vpack.c.bf16 %v401, %v397
    %v407 = vld [vmem:[%s3 + $0x10] sm:$0xff]
    %409 = vset.pattern.permute.xlu0 0
    %410 = vperm.xlu0 %409, %v407
    %v411 = vpop.permute.xlu0 %410
    %v414 = vsel %vm272, %v402, 0
    %416 = vmatprep.subr.bf16.mxu0 %v404
    %417 = vmatpush1.bf16.msra.mxu0 %v403
    %418 = vmatprep.subr.bf16.mxu0 0
    %419 = vmatpush1.bf16.msra.mxu0 0
    %420 = vmatprep.subr.bf16.mxu0 0
    %421 = vmatpush1.bf16.msra.mxu0 0
    %422 = vmatprep.subr.bf16.mxu0 0
    %423 = vmatpush1.bf16.msra.mxu0 0
    %424 = vmatprep.subr.bf16.mxu0 0
    %425 = vmatpush1.bf16.msra.mxu0 0
    %426 = vmatprep.subr.bf16.mxu0 0
    %427 = vmatpush1.bf16.msra.mxu0 0
    %428 = vmatprep.subr.bf16.mxu0 0
    %429 = vmatpush1.bf16.msra.mxu0 0
    %430 = vmatprep.subr.bf16.mxu0 0
    %431 = vmatpush1.bf16.msra.mxu0 0
    %432 = vmatprep.subr.bf16.mxu0 0
    %433 = vmatpush1.bf16.msra.mxu0 0
    %434 = vmatprep.subr.bf16.mxu0 0
    %435 = vmatpush1.bf16.msra.mxu0 0
    %436 = vmatprep.subr.bf16.mxu0 0
    %437 = vmatpush1.bf16.msra.mxu0 0
    %438 = vmatprep.subr.bf16.mxu0 0
    %439 = vmatpush1.bf16.msra.mxu0 0
    %440 = vmatprep.subr.bf16.mxu0 0
    %441 = vmatpush1.bf16.msra.mxu0 0
    %442 = vmatprep.subr.bf16.mxu0 0
    %443 = vmatpush1.bf16.msra.mxu0 0
    %444 = vmatprep.subr.bf16.mxu0 0
    %445 = vmatpush1.bf16.msra.mxu0 0
    %446 = vmatprep.subr.bf16.mxu0 0
    %447 = vmatpush1.bf16.msra.mxu0 0
    %448 = vmatprep.mubr.bf16.mxu0 0
    %449 = vmatmul.mubr.bf16.gmra.mrb[0].mxu0 %v414
    %v450 = vpop.f32.mrb[0].mxu0
    %v451 = vadd.f32 %v411, %v450
    %v452 = vpop.f32.mrb[0].mxu0
    %v453 = vadd.f32 %v411, %v452
    %v454 = vpop.f32.mrb[0].mxu0
    %v455 = vpop.f32.mrb[0].mxu0
    %456 = vdwg.mxu0
    %457 = vmatprep.subr.bf16.mxu0 %v406
    %458 = vmatpush1.bf16.msra.mxu0 %v405
    %459 = vmatprep.subr.bf16.mxu0 0
    %460 = vmatpush1.bf16.msra.mxu0 0
    %461 = vmatprep.subr.bf16.mxu0 0
    %462 = vmatpush1.bf16.msra.mxu0 0
    %463 = vmatprep.subr.bf16.mxu0 0
    %464 = vmatpush1.bf16.msra.mxu0 0
    %465 = vmatprep.subr.bf16.mxu0 0
    %466 = vmatpush1.bf16.msra.mxu0 0
    %467 = vmatprep.subr.bf16.mxu0 0
    %468 = vmatpush1.bf16.msra.mxu0 0
    %469 = vmatprep.subr.bf16.mxu0 0
    %470 = vmatpush1.bf16.msra.mxu0 0
    %471 = vmatprep.subr.bf16.mxu0 0
    %472 = vmatpush1.bf16.msra.mxu0 0
    %473 = vmatprep.subr.bf16.mxu0 0
    %474 = vmatpush1.bf16.msra.mxu0 0
    %475 = vmatprep.subr.bf16.mxu0 0
    %476 = vmatpush1.bf16.msra.mxu0 0
    %477 = vmatprep.subr.bf16.mxu0 0
    %478 = vmatpush1.bf16.msra.mxu0 0
    %479 = vmatprep.subr.bf16.mxu0 0
    %480 = vmatpush1.bf16.msra.mxu0 0
    %481 = vmatprep.subr.bf16.mxu0 0
    %482 = vmatpush1.bf16.msra.mxu0 0
    %483 = vmatprep.subr.bf16.mxu0 0
    %484 = vmatpush1.bf16.msra.mxu0 0
    %485 = vmatprep.subr.bf16.mxu0 0
    %486 = vmatpush1.bf16.msra.mxu0 0
    %487 = vmatprep.subr.bf16.mxu0 0
    %488 = vmatpush1.bf16.msra.mxu0 0
    %489 = vmatprep.mubr.bf16.mxu0 0
    %490 = vmatmul.mubr.bf16.gmra.mrb[0].mxu0 %v414
    %v491 = vpop.f32.mrb[0].mxu0
    %v492 = vadd.f32 %v411, %v491
    %v493 = vpop.f32.mrb[0].mxu0
    %v494 = vadd.f32 %v411, %v493
    %v495 = vpop.f32.mrb[0].mxu0
    %v496 = vpop.f32.mrb[0].mxu0
    %497 = vdwg.mxu0
    %498 = vst [vmem:[#allocation5] sm:$0xff] %v451
    %499 = vst [vmem:[#allocation5 + $0x8] sm:$0xff] %v453
    %500 = vst [vmem:[#allocation5 + $0x10] sm:$0xff] %v492
    %501 = vst [vmem:[#allocation5 + $0x18] sm:$0xff] %v494
    // Predicated region
    $region22: #{tpu_custom_call.1} parent=1 // pred_check
      _
    $region23: #{tpu_custom_call.1} parent=1 // pred_check_branch
      %503 = sbr.rel (0) target = $region25
    $region24: #{tpu_custom_call.1} parent=1 // pred_region
      %s505 = ssub.s32 512, 512
      %506 = vsyncadd [#allocation4], %s505
      %s508 = sshll.u32 [#allocation5], 4
      %s509 = int_to_ptr.vmem [resolvable:$true] %s508
      %511 = dma.vmem_to_hbm [thread:$0]  %s509, 512, %s4, [#allocation4]
    $region25: #{tpu_custom_call.1} parent=1 // pred_fallthru
      _
    // Predicated region
    $region26: #{tpu_custom_call.1} parent=1 // pred_check
      _
    $region27: #{tpu_custom_call.1} parent=1 // pred_check_branch
      %513 = sbr.rel (0) target = $region29
    $region28: #{tpu_custom_call.1} parent=1 // pred_region
      %514 = dma.done [#allocation4], 512
    $region29: #{tpu_custom_call.1} parent=1 // pred_fallthru
      _
    %515 = vsyncpa [#allocation3], 1
    %516 = vsyncpa [#allocation4], 1

</llo_original>
